<compile_context>
chip_gen: v7x
topology: tpu7x:2x2x1
jax: 0.10.0
libtpu: 0.0.40
codegen_flags: <defaults>
</compile_context>

<pallas_src>
import math

import jax
import jax.numpy as jnp
from jax.experimental import pallas as pl
from jax.experimental.pallas import tpu as pltpu


def _mlp_pair_kernel(s_ref, o_ref, w1_ref, b1_ref, w2_ref, b2_ref, out_ref):
    """Fused MLPPairEncoder forward on one (block_n, E) batch tile."""
    E = s_ref.shape[-1]
    s = s_ref[...]                                   # (block_n, E)
    o = o_ref[...]                                   # (block_n, E)

    # cat([s, o, s*o], -1) @ W1  ==  s @ W1[:E] + o @ W1[E:2E] + (s*o) @ W1[2E:]
    h = (jnp.dot(s, w1_ref[0:E, :], preferred_element_type=jnp.float32)
         + jnp.dot(o, w1_ref[E:2 * E, :], preferred_element_type=jnp.float32)
         + jnp.dot(s * o, w1_ref[2 * E:3 * E, :], preferred_element_type=jnp.float32)
         + b1_ref[...])
    h = jnp.maximum(h, 0.0)                          # ReLU
    # Dropout (p=0.1) is identity in eval mode.

    out_ref[...] = (jnp.dot(h, w2_ref[...], preferred_element_type=jnp.float32)
                    + b2_ref[...]).astype(out_ref.dtype)


def mlp_pair_encoder(params, subjects, objects, *, block_n=8):
    """subjects/objects: (N, E) float32 -> (N, E) float32."""
    N, E = subjects.shape
    assert N % block_n == 0, "demo keeps N a multiple of the batch tile"
    grid = (N // block_n,)
    return pl.pallas_call(
        _mlp_pair_kernel,
        out_shape=jax.ShapeDtypeStruct((N, E), jnp.float32),
        grid=grid,
        in_specs=[
            pl.BlockSpec((block_n, E), lambda i: (i, 0)),   # subjects tile
            pl.BlockSpec((block_n, E), lambda i: (i, 0)),   # objects tile
            pl.BlockSpec((3 * E, E), lambda i: (0, 0)),     # W1 (in, out), resident
            pl.BlockSpec((1, E), lambda i: (0, 0)),         # b1
            pl.BlockSpec((E, E), lambda i: (0, 0)),         # W2 (in, out), resident
            pl.BlockSpec((1, E), lambda i: (0, 0)),         # b2
        ],
        out_specs=pl.BlockSpec((block_n, E), lambda i: (i, 0)),
        compiler_params=pltpu.CompilerParams(
            dimension_semantics=("parallel",)),             # batch tiles independent
    )(subjects, objects, params['w1'], params['b1'], params['w2'], params['b2'])


def init_params(key, E):
    """PyTorch-style Linear init, but weights stored pre-transposed as (in, out)."""
    k1, k2, k3, k4 = jax.random.split(key, 4)

    def u(k, shape, fan_in):
        r = 1.0 / math.sqrt(fan_in)
        return jax.random.uniform(k, shape, jnp.float32, -r, r)

    return {
        'w1': u(k1, (3 * E, E), 3 * E),      # Linear(3E, E).weight^T
        'b1': u(k2, (1, E), 3 * E),
        'w2': u(k3, (E, E), E),              # Linear(E, E).weight^T
        'b2': u(k4, (1, E), E),
    }


def _reference(params, s, o):
    cat = jnp.concatenate([s, o, s * o], axis=-1)
    h = jnp.maximum(cat @ params['w1'] + params['b1'], 0.0)
    return h @ params['w2'] + params['b2']


if __name__ == "__main__":
    key = jax.random.PRNGKey(0)
    N, E = 16, 128                           # small, lane-dense shapes

    pkey, skey, okey = jax.random.split(key, 3)
    params = init_params(pkey, E)
    subjects = jax.random.normal(skey, (N, E), jnp.float32)
    objects = jax.random.normal(okey, (N, E), jnp.float32)

    fwd = jax.jit(mlp_pair_encoder)
    out = fwd(params, subjects, objects)
    jax.block_until_ready(out)

    assert out.shape == (N, E)
    ref = _reference(params, subjects, objects)
    assert jnp.allclose(out, ref, rtol=1e-5, atol=1e-4)
    print("KERNEL_OK")
</pallas_src>

<mosaic_0001>
module attributes {stable_mosaic.version = 11 : i64} {
  func.func @_mlp_pair_kernel(%arg0: i32, %arg1: memref<8x128xf32, #tpu.memory_space<vmem>>, %arg2: memref<8x128xf32, #tpu.memory_space<vmem>>, %arg3: memref<384x128xf32, #tpu.memory_space<vmem>>, %arg4: memref<1x128xf32, #tpu.memory_space<vmem>>, %arg5: memref<128x128xf32, #tpu.memory_space<vmem>>, %arg6: memref<1x128xf32, #tpu.memory_space<vmem>>, %arg7: memref<8x128xf32, #tpu.memory_space<vmem>>) attributes {dimension_semantics = [#tpu.dimension_semantics<parallel>], iteration_bounds = array<i64: 2>, scalar_prefetch = 0 : i64, scratch_operands = 0 : i64, tpu.core_type = #tpu.core_type<tc>, window_params = [{transform_indices = @transform_0, window_bounds = array<i64: 8, 128>}, {transform_indices = @transform_1, window_bounds = array<i64: 8, 128>}, {pipeline_mode = #tpu.pipeline_mode<synchronous>, transform_indices = @transform_2, window_bounds = array<i64: 384, 128>}, {pipeline_mode = #tpu.pipeline_mode<synchronous>, transform_indices = @transform_3, window_bounds = array<i64: 1, 128>}, {pipeline_mode = #tpu.pipeline_mode<synchronous>, transform_indices = @transform_4, window_bounds = array<i64: 128, 128>}, {pipeline_mode = #tpu.pipeline_mode<synchronous>, transform_indices = @transform_5, window_bounds = array<i64: 1, 128>}, {transform_indices = @transform_6, window_bounds = array<i64: 8, 128>}]} {
    %c0 = arith.constant 0 : index
    %c0_0 = arith.constant 0 : index
    %0 = vector.load %arg1[%c0, %c0_0] : memref<8x128xf32, #tpu.memory_space<vmem>>, vector<8x128xf32>
    %c0_1 = arith.constant 0 : index
    %c0_2 = arith.constant 0 : index
    %1 = vector.load %arg2[%c0_1, %c0_2] : memref<8x128xf32, #tpu.memory_space<vmem>>, vector<8x128xf32>
    %c0_3 = arith.constant 0 : index
    %c0_4 = arith.constant 0 : index
    %2 = vector.load %arg3[%c0_3, %c0_4] : memref<384x128xf32, #tpu.memory_space<vmem>>, vector<128x128xf32>
    %cst = arith.constant dense<0.000000e+00> : vector<8x128xf32>
    %3 = tpu.matmul %0, %2, %cst {dimension_numbers = #tpu.dot_dimension_numbers<[1], [0], [0], [1], [0, 0, 1, 1], [], []>} : vector<8x128xf32>, vector<128x128xf32>, vector<8x128xf32> -> vector<8x128xf32>
    %c128 = arith.constant 128 : index
    %c0_5 = arith.constant 0 : index
    %4 = vector.load %arg3[%c128, %c0_5] : memref<384x128xf32, #tpu.memory_space<vmem>>, vector<128x128xf32>
    %cst_6 = arith.constant dense<0.000000e+00> : vector<8x128xf32>
    %5 = tpu.matmul %1, %4, %cst_6 {dimension_numbers = #tpu.dot_dimension_numbers<[1], [0], [0], [1], [0, 0, 1, 1], [], []>} : vector<8x128xf32>, vector<128x128xf32>, vector<8x128xf32> -> vector<8x128xf32>
    %6 = arith.addf %3, %5 : vector<8x128xf32>
    %7 = arith.mulf %0, %1 : vector<8x128xf32>
    %c256 = arith.constant 256 : index
    %c0_7 = arith.constant 0 : index
    %8 = vector.load %arg3[%c256, %c0_7] : memref<384x128xf32, #tpu.memory_space<vmem>>, vector<128x128xf32>
    %cst_8 = arith.constant dense<0.000000e+00> : vector<8x128xf32>
    %9 = tpu.matmul %7, %8, %cst_8 {dimension_numbers = #tpu.dot_dimension_numbers<[1], [0], [0], [1], [0, 0, 1, 1], [], []>} : vector<8x128xf32>, vector<128x128xf32>, vector<8x128xf32> -> vector<8x128xf32>
    %10 = arith.addf %6, %9 : vector<8x128xf32>
    %c0_9 = arith.constant 0 : index
    %c0_10 = arith.constant 0 : index
    %11 = vector.load %arg4[%c0_9, %c0_10] : memref<1x128xf32, #tpu.memory_space<vmem>>, vector<1x128xf32>
    %12 = vector.broadcast %11 : vector<1x128xf32> to vector<8x128xf32>
    %13 = arith.addf %10, %12 : vector<8x128xf32>
    %cst_11 = arith.constant 0.000000e+00 : f32
    %14 = vector.broadcast %cst_11 : f32 to vector<8x128xf32>
    %15 = arith.maximumf %13, %14 : vector<8x128xf32>
    %c0_12 = arith.constant 0 : index
    %c0_13 = arith.constant 0 : index
    %16 = vector.load %arg5[%c0_12, %c0_13] : memref<128x128xf32, #tpu.memory_space<vmem>>, vector<128x128xf32>
    %cst_14 = arith.constant dense<0.000000e+00> : vector<8x128xf32>
    %17 = tpu.matmul %15, %16, %cst_14 {dimension_numbers = #tpu.dot_dimension_numbers<[1], [0], [0], [1], [0, 0, 1, 1], [], []>} : vector<8x128xf32>, vector<128x128xf32>, vector<8x128xf32> -> vector<8x128xf32>
    %c0_15 = arith.constant 0 : index
    %c0_16 = arith.constant 0 : index
    %18 = vector.load %arg6[%c0_15, %c0_16] : memref<1x128xf32, #tpu.memory_space<vmem>>, vector<1x128xf32>
    %19 = vector.broadcast %18 : vector<1x128xf32> to vector<8x128xf32>
    %20 = arith.addf %17, %19 : vector<8x128xf32>
    %c0_17 = arith.constant 0 : index
    %c0_18 = arith.constant 0 : index
    %21 = vector.load %arg7[%c0_17, %c0_18] : memref<8x128xf32, #tpu.memory_space<vmem>>, vector<8x128xf32>
    tpu.vector_store %arg7[%c0_17, %c0_18], %20 {strides = array<i32>} : memref<8x128xf32, #tpu.memory_space<vmem>>, vector<8x128xf32>,
    return
  }
  func.func @transform_0(%arg0: i32) -> (i32, i32) {
    %c0_i32 = arith.constant 0 : i32
    %c0_i32_0 = arith.constant 0 : i32
    return %arg0, %c0_i32 : i32, i32
  }
  func.func @transform_1(%arg0: i32) -> (i32, i32) {
    %c0_i32 = arith.constant 0 : i32
    %c0_i32_0 = arith.constant 0 : i32
    return %arg0, %c0_i32 : i32, i32
  }
  func.func @transform_2(%arg0: i32) -> (i32, i32) {
    %c0_i32 = arith.constant 0 : i32
    %c0_i32_0 = arith.constant 0 : i32
    %c0_i32_1 = arith.constant 0 : i32
    return %c0_i32, %c0_i32_0 : i32, i32
  }
  func.func @transform_3(%arg0: i32) -> (i32, i32) {
    %c0_i32 = arith.constant 0 : i32
    %c0_i32_0 = arith.constant 0 : i32
    %c0_i32_1 = arith.constant 0 : i32
    return %c0_i32, %c0_i32_0 : i32, i32
  }
  func.func @transform_4(%arg0: i32) -> (i32, i32) {
    %c0_i32 = arith.constant 0 : i32
    %c0_i32_0 = arith.constant 0 : i32
    %c0_i32_1 = arith.constant 0 : i32
    return %c0_i32, %c0_i32_0 : i32, i32
  }
  func.func @transform_5(%arg0: i32) -> (i32, i32) {
    %c0_i32 = arith.constant 0 : i32
    %c0_i32_0 = arith.constant 0 : i32
    %c0_i32_1 = arith.constant 0 : i32
    return %c0_i32, %c0_i32_0 : i32, i32
  }
  func.func @transform_6(%arg0: i32) -> (i32, i32) {
    %c0_i32 = arith.constant 0 : i32
    %c0_i32_0 = arith.constant 0 : i32
    return %arg0, %c0_i32 : i32, i32
  }
}

</mosaic_0001>

<llo_original>
// kernel: mlp_pair_encoder.1
$region0: #{mlp_pair_encoder.1}
  #allocation0 [shape = 'u32[]', space=smem, size = 0x4, offset = 0x4, fixed_abs, tag = 'smem constant byte address 0x4 - core index']
  #allocation1 [shape = 'u32[144,128]{1,0:T(1,128)}', space=vmem, size = 0x12000, scoped, tag = 'internal scratch']
  %s0 = inlined_call_operand.hbm [shape: f32[16,128], index: 0, kind: input, shape index: {}]
  %s1 = inlined_call_operand.vmem [shape: f32[16,128], index: 1, kind: input, shape index: {}]
  %s2 = inlined_call_operand.hbm [shape: f32[384,128], index: 2, kind: input, shape index: {}]
  %s3 = inlined_call_operand.hbm [shape: f32[1,128], index: 3, kind: input, shape index: {}]
  %s4 = inlined_call_operand.hbm [shape: f32[128,128], index: 4, kind: input, shape index: {}]
  %s5 = inlined_call_operand.vmem [shape: f32[1,128], index: 5, kind: input, shape index: {}]
  %s6 = inlined_call_operand.hbm [shape: f32[16,128], index: 6, kind: output, shape index: {}]
  %s7 = sld [smem:[#allocation0]]
  $region73: #{mlp_pair_encoder.1} parent=0
    _
  %s9 = ssub.s32 1, %s7
  %s10 = scalar_select 0, %s9, %s7
  $region1: #{mlp_pair_encoder.1} parent=0
    #allocation2 [shape = 'u8[8192]{0}', space=vmem, size = 0x2000, scoped, tag = 'input window, operand 0']
    #allocation3 [shape = 's32[2]{0}', space=sflag, size = 0x8, scoped, tag = 'scoped memory for mlp_pair_encoder.1']
    #allocation4 [shape = 's32[2]{0}', space=sflag, size = 0x8, scoped, tag = 'scoped memory for mlp_pair_encoder.1']
    #allocation5 [shape = 'u8[196608]{0}', space=vmem, size = 0x30000, scoped, tag = 'input window, operand 2, single buffered']
    #allocation6 [shape = 's32[1]{0}', space=sflag, size = 0x4, scoped, tag = 'scoped memory for mlp_pair_encoder.1']
    #allocation7 [shape = 'u8[512]{0}', space=vmem, size = 0x400, scoped, tag = 'input window, operand 3, single buffered']
    #allocation8 [shape = 'u8[65536]{0}', space=vmem, size = 0x10000, scoped, tag = 'input window, operand 4, single buffered']
    #allocation9 [shape = 's32[1]{0}', space=sflag, size = 0x4, scoped, tag = 'scoped memory for mlp_pair_encoder.1']
    #allocation10 [shape = 'u8[8192]{0}', space=vmem, size = 0x2000, scoped, tag = 'output window, operand 0']
    %11 = vsyncpa [#allocation3], 0
    %s12 = scalar_lea.sflag [#allocation3], 1
    %13 = vsyncpa %s12, 0
    %14 = vsyncpa [#allocation6], 0
    %15 = vsyncpa [#allocation9], 0
    %16 = vsyncpa [#allocation4], 0
    %s17 = scalar_lea.sflag [#allocation4], 1
    %18 = vsyncpa %s17, 0
    loop: start=0, step=1, limit=4
    $region2: #{mlp_pair_encoder.1} parent=1 // loop_pre_header
      _
    $region3: #{mlp_pair_encoder.1} parent=1 // loop_header
      %s20 = sphi 0, %s24
      %p21 = scmp.ge.s32.totalorder %s20, 4
      %s30 = sphi 0, %s32
      %s33 = sphi 0, %s30
      %s34 = sphi 0, %s33
      %s50 = sphi 0, %s34
      %s56 = sphi 0, %s58
      %s59 = sphi 0, %s56
      %s60 = sphi 0, %s59
      %s76 = sphi 0, %s60
      %s80 = sphi 0, %s80
      %s82 = sphi 0, %s80
      %s83 = sphi 0, %s82
      %s97 = sphi 0, %s83
      %s101 = sphi 0, %s101
      %s103 = sphi 0, %s101
      %s104 = sphi 0, %s103
      %s118 = sphi 0, %s104
      %s122 = sphi 0, %s122
      %s124 = sphi 0, %s122
      %s125 = sphi 0, %s124
      %s139 = sphi 0, %s125
      %s143 = sphi 0, %s143
      %s145 = sphi 0, %s143
      %s146 = sphi 0, %s145
      %s160 = sphi 0, %s146
      %s166 = sphi 0, %s168
      %s169 = sphi 0, %s166
      %s170 = sphi 0, %s169
      %s186 = sphi 0, %s170
    $region4: #{mlp_pair_encoder.1} parent=1 // loop_header_branch
      %23 = sbr.rel (%p21) target = $region8
    $region5: #{mlp_pair_encoder.1} parent=1 // loop_body
      %s25 = ssub.s32 %s20, 1
      %s26 = ssub.s32 %s20, 2
      %s27 = sadd.s32 %s20, 1
      %s28 = ssub.s32 %s20, %s27
      %p29 = scmp.eq.s32.totalorder %s28, 0
      %s31 = sadd.s32 %s30, 1
      %s32 = scalar_select %p29, %s30, %s31
      %p35 = pneg %p29
      %p36 = scmp.eq.s32.totalorder %s20, 1
      %p37 = por %p35, %p36
      %p38 = scmp.ne.s32.totalorder %s30, %s33
      %p39 = scmp.eq.s32.totalorder %s20, 0
      %p40 = por %p38, %p39
      %p41 = scmp.ne.s32.totalorder %s30, %s33
      %p42 = scmp.eq.s32.totalorder %s25, 1
      %p43 = por %p41, %p42
      %p44 = scmp.ne.s32.totalorder %s33, %s34
      %p45 = scmp.eq.s32.totalorder %s25, 0
      %p46 = por %p44, %p45
      %p47 = scmp.ne.s32.totalorder %s33, %s34
      %p48 = scmp.eq.s32.totalorder %s26, 1
      %p49 = por %p47, %p48
      %p51 = scmp.ne.s32.totalorder %s34, %s50
      %p52 = scmp.eq.s32.totalorder %s26, 0
      %p53 = por %p51, %p52
      %s54 = ssub.s32 %s20, %s27
      %p55 = scmp.eq.s32.totalorder %s54, 0
      %s57 = sadd.s32 %s56, 1
      %s58 = scalar_select %p55, %s56, %s57
      %p61 = pneg %p55
      %p62 = scmp.eq.s32.totalorder %s20, 1
      %p63 = por %p61, %p62
      %p64 = scmp.ne.s32.totalorder %s56, %s59
      %p65 = scmp.eq.s32.totalorder %s20, 0
      %p66 = por %p64, %p65
      %p67 = scmp.ne.s32.totalorder %s56, %s59
      %p68 = scmp.eq.s32.totalorder %s25, 1
      %p69 = por %p67, %p68
      %p70 = scmp.ne.s32.totalorder %s59, %s60
      %p71 = scmp.eq.s32.totalorder %s25, 0
      %p72 = por %p70, %p71
      %p73 = scmp.ne.s32.totalorder %s59, %s60
      %p74 = scmp.eq.s32.totalorder %s26, 1
      %p75 = por %p73, %p74
      %p77 = scmp.ne.s32.totalorder %s60, %s76
      %p78 = scmp.eq.s32.totalorder %s26, 0
      %p79 = por %p77, %p78
      %s81 = sadd.s32 %s80, 1
      %p84 = scmp.eq.s32.totalorder %s20, 1
      %p85 = scmp.ne.s32.totalorder %s80, %s82
      %p86 = scmp.eq.s32.totalorder %s20, 0
      %p87 = por %p85, %p86
      %p88 = scmp.ne.s32.totalorder %s80, %s82
      %p89 = scmp.eq.s32.totalorder %s25, 1
      %p90 = por %p88, %p89
      %p91 = scmp.ne.s32.totalorder %s82, %s83
      %p92 = scmp.eq.s32.totalorder %s25, 0
      %p93 = por %p91, %p92
      %p94 = scmp.ne.s32.totalorder %s82, %s83
      %p95 = scmp.eq.s32.totalorder %s26, 1
      %p96 = por %p94, %p95
      %p98 = scmp.ne.s32.totalorder %s83, %s97
      %p99 = scmp.eq.s32.totalorder %s26, 0
      %p100 = por %p98, %p99
      %s102 = sadd.s32 %s101, 1
      %p105 = scmp.eq.s32.totalorder %s20, 1
      %p106 = scmp.ne.s32.totalorder %s101, %s103
      %p107 = scmp.eq.s32.totalorder %s20, 0
      %p108 = por %p106, %p107
      %p109 = scmp.ne.s32.totalorder %s101, %s103
      %p110 = scmp.eq.s32.totalorder %s25, 1
      %p111 = por %p109, %p110
      %p112 = scmp.ne.s32.totalorder %s103, %s104
      %p113 = scmp.eq.s32.totalorder %s25, 0
      %p114 = por %p112, %p113
      %p115 = scmp.ne.s32.totalorder %s103, %s104
      %p116 = scmp.eq.s32.totalorder %s26, 1
      %p117 = por %p115, %p116
      %p119 = scmp.ne.s32.totalorder %s104, %s118
      %p120 = scmp.eq.s32.totalorder %s26, 0
      %p121 = por %p119, %p120
      %s123 = sadd.s32 %s122, 1
      %p126 = scmp.eq.s32.totalorder %s20, 1
      %p127 = scmp.ne.s32.totalorder %s122, %s124
      %p128 = scmp.eq.s32.totalorder %s20, 0
      %p129 = por %p127, %p128
      %p130 = scmp.ne.s32.totalorder %s122, %s124
      %p131 = scmp.eq.s32.totalorder %s25, 1
      %p132 = por %p130, %p131
      %p133 = scmp.ne.s32.totalorder %s124, %s125
      %p134 = scmp.eq.s32.totalorder %s25, 0
      %p135 = por %p133, %p134
      %p136 = scmp.ne.s32.totalorder %s124, %s125
      %p137 = scmp.eq.s32.totalorder %s26, 1
      %p138 = por %p136, %p137
      %p140 = scmp.ne.s32.totalorder %s125, %s139
      %p141 = scmp.eq.s32.totalorder %s26, 0
      %p142 = por %p140, %p141
      %s144 = sadd.s32 %s143, 1
      %p147 = scmp.eq.s32.totalorder %s20, 1
      %p148 = scmp.ne.s32.totalorder %s143, %s145
      %p149 = scmp.eq.s32.totalorder %s20, 0
      %p150 = por %p148, %p149
      %p151 = scmp.ne.s32.totalorder %s143, %s145
      %p152 = scmp.eq.s32.totalorder %s25, 1
      %p153 = por %p151, %p152
      %p154 = scmp.ne.s32.totalorder %s145, %s146
      %p155 = scmp.eq.s32.totalorder %s25, 0
      %p156 = por %p154, %p155
      %p157 = scmp.ne.s32.totalorder %s145, %s146
      %p158 = scmp.eq.s32.totalorder %s26, 1
      %p159 = por %p157, %p158
      %p161 = scmp.ne.s32.totalorder %s146, %s160
      %p162 = scmp.eq.s32.totalorder %s26, 0
      %p163 = por %p161, %p162
      %s164 = ssub.s32 %s20, %s27
      %p165 = scmp.eq.s32.totalorder %s164, 0
      %s167 = sadd.s32 %s166, 1
      %s168 = scalar_select %p165, %s166, %s167
      %p171 = pneg %p165
      %p172 = scmp.eq.s32.totalorder %s20, 1
      %p173 = por %p171, %p172
      %p174 = scmp.ne.s32.totalorder %s166, %s169
      %p175 = scmp.eq.s32.totalorder %s20, 0
      %p176 = por %p174, %p175
      %p177 = scmp.ne.s32.totalorder %s166, %s169
      %p178 = scmp.eq.s32.totalorder %s25, 1
      %p179 = por %p177, %p178
      %p180 = scmp.ne.s32.totalorder %s169, %s170
      %p181 = scmp.eq.s32.totalorder %s25, 0
      %p182 = por %p180, %p181
      %p183 = scmp.ne.s32.totalorder %s169, %s170
      %p184 = scmp.eq.s32.totalorder %s26, 1
      %p185 = por %p183, %p184
      %p187 = scmp.ne.s32.totalorder %s170, %s186
      %p188 = scmp.eq.s32.totalorder %s26, 0
      %p189 = por %p187, %p188
      %p190 = scmp.le.s32.totalorder 1, %s20
      %p191 = scmp.lt.s32.totalorder %s20, 3
      %p192 = pnand %p190, %p191
      %p193 = pneg %p192
      // Predicated region
      $region9: #{mlp_pair_encoder.1} parent=5 // pred_check
        _
      $region10: #{mlp_pair_encoder.1} parent=5 // pred_check_branch
        %195 = sbr.rel (%p192) target = $region12
      $region11: #{mlp_pair_encoder.1} parent=5 // pred_region
        %s196 = ssub.s32 %s20, 1
        // Predicated region
        $region13: #{mlp_pair_encoder.1} parent=11 // pred_check
          %p197 = pneg %p93
        $region14: #{mlp_pair_encoder.1} parent=11 // pred_check_branch
          %199 = sbr.rel (%p197) target = $region16
        $region15: #{mlp_pair_encoder.1} parent=11 // pred_region
          %s201 = ssub.s32 6144, 6144
          %202 = vsyncadd [#allocation6], %s201
          %s203 = sshll.u32 [#allocation5], 4
          %s204 = int_to_ptr.vmem [resolvable:$true] %s203
          %209 = dma.hbm_to_vmem [thread:$0]  %s2, 6144, %s204, [#allocation6], 128, 128, 8
        $region16: #{mlp_pair_encoder.1} parent=11 // pred_fallthru
          _
        // Predicated region
        $region17: #{mlp_pair_encoder.1} parent=11 // pred_check
          %p210 = pneg %p114
        $region18: #{mlp_pair_encoder.1} parent=11 // pred_check_branch
          %212 = sbr.rel (%p210) target = $region20
        $region19: #{mlp_pair_encoder.1} parent=11 // pred_region
          %s214 = ssub.s32 16, 16
          %215 = vsyncadd [#allocation6], %s214
          %s217 = sshll.u32 [#allocation7], 4
          %s218 = int_to_ptr.vmem [resolvable:$true] %s217
          %220 = dma.hbm_to_vmem [thread:$0]  %s3, 16, %s218, [#allocation6]
        $region20: #{mlp_pair_encoder.1} parent=11 // pred_fallthru
          _
        // Predicated region
        $region21: #{mlp_pair_encoder.1} parent=11 // pred_check
          %p221 = pneg %p135
        $region22: #{mlp_pair_encoder.1} parent=11 // pred_check_branch
          %223 = sbr.rel (%p221) target = $region24
        $region23: #{mlp_pair_encoder.1} parent=11 // pred_region
          %s225 = ssub.s32 2048, 2048
          %226 = vsyncadd [#allocation9], %s225
          %s227 = sshll.u32 [#allocation8], 4
          %s228 = int_to_ptr.vmem [resolvable:$true] %s227
          %233 = dma.hbm_to_vmem [thread:$0]  %s4, 2048, %s228, [#allocation9], 128, 128, 8
        $region24: #{mlp_pair_encoder.1} parent=11 // pred_fallthru
          _
        // Predicated region
        $region25: #{mlp_pair_encoder.1} parent=11 // pred_check
          %p234 = pneg %p156
        $region26: #{mlp_pair_encoder.1} parent=11 // pred_check_branch
          %236 = sbr.rel (%p234) target = $region28
        $region27: #{mlp_pair_encoder.1} parent=11 // pred_region
          _
        $region28: #{mlp_pair_encoder.1} parent=11 // pred_fallthru
          _
      $region12: #{mlp_pair_encoder.1} parent=5 // pred_fallthru
        _
      %p237 = scmp.lt.s32.totalorder %s20, 2
      // Predicated region
      $region29: #{mlp_pair_encoder.1} parent=5 // pred_check
        %p238 = pneg %p237
      $region30: #{mlp_pair_encoder.1} parent=5 // pred_check_branch
        %240 = sbr.rel (%p238) target = $region32
      $region31: #{mlp_pair_encoder.1} parent=5 // pred_region
        // Predicated region
        $region33: #{mlp_pair_encoder.1} parent=31 // pred_check
          %p241 = pneg %p40
        $region34: #{mlp_pair_encoder.1} parent=31 // pred_check_branch
          %243 = sbr.rel (%p241) target = $region36
        $region35: #{mlp_pair_encoder.1} parent=31 // pred_region
          %s244 = sand.u32 %s30, 1
          %s245 = scalar_lea.sflag [#allocation3], %s244
          %s246 = sand.u32 %s30, 1
          %s247 = smul.addr %s246, 8
          %s248 = scalar_lea.vmem [#allocation2], %s247
          %s250 = ssub.s32 128, 128
          %251 = vsyncadd %s245, %s250
          %s252 = smul.addr %s20, 128
          %s253 = scalar_lea.hbm %s0, %s252
          %s255 = sshll.u32 %s248, 4
          %s256 = int_to_ptr.vmem [resolvable:$true] %s255
          %258 = dma.hbm_to_vmem [thread:$0]  %s253, 128, %s256, %s245
        $region36: #{mlp_pair_encoder.1} parent=31 // pred_fallthru
          _
        // Predicated region
        $region37: #{mlp_pair_encoder.1} parent=31 // pred_check
          %p259 = pneg %p66
        $region38: #{mlp_pair_encoder.1} parent=31 // pred_check_branch
          %261 = sbr.rel (%p259) target = $region40
        $region39: #{mlp_pair_encoder.1} parent=31 // pred_region
          %p262 = scmp.lt.s32.totalorder %s20, 1
          %s263 = scalar_select %p262, %s20, 1
          %s264 = smul.addr %s263, 8
          %s265 = scalar_lea.vmem %s1, %s264
        $region40: #{mlp_pair_encoder.1} parent=31 // pred_fallthru
          _
      $region32: #{mlp_pair_encoder.1} parent=5 // pred_fallthru
        _
      %p266 = scmp.le.s32.totalorder 1, %s20
      %p267 = scmp.lt.s32.totalorder %s20, 3
      %p268 = pnand %p266, %p267
      %p269 = pneg %p268
      // Predicated region
      $region41: #{mlp_pair_encoder.1} parent=5 // pred_check
        _
      $region42: #{mlp_pair_encoder.1} parent=5 // pred_check_branch
        %271 = sbr.rel (%p268) target = $region44
      $region43: #{mlp_pair_encoder.1} parent=5 // pred_region
        %s272 = ssub.s32 %s20, 1
        %s273 = sand.u32 %s33, 1
        %s274 = scalar_lea.sflag [#allocation3], %s273
        %s275 = sand.u32 %s33, 1
        %s276 = smul.addr %s275, 8
        %s277 = scalar_lea.vmem [#allocation2], %s276
        // Predicated region
        $region45: #{mlp_pair_encoder.1} parent=43 // pred_check
          %p278 = pneg %p46
        $region46: #{mlp_pair_encoder.1} parent=43 // pred_check_branch
          %280 = sbr.rel (%p278) target = $region48
        $region47: #{mlp_pair_encoder.1} parent=43 // pred_region
          %281 = dma.done %s274, 128
        $region48: #{mlp_pair_encoder.1} parent=43 // pred_fallthru
          _
        // Predicated region
        $region49: #{mlp_pair_encoder.1} parent=43 // pred_check
          %p282 = pneg %p93
        $region50: #{mlp_pair_encoder.1} parent=43 // pred_check_branch
          %284 = sbr.rel (%p282) target = $region52
        $region51: #{mlp_pair_encoder.1} parent=43 // pred_region
          %285 = dma.done [#allocation6], 6144
        $region52: #{mlp_pair_encoder.1} parent=43 // pred_fallthru
          _
        // Predicated region
        $region53: #{mlp_pair_encoder.1} parent=43 // pred_check
          %p286 = pneg %p114
        $region54: #{mlp_pair_encoder.1} parent=43 // pred_check_branch
          %288 = sbr.rel (%p286) target = $region56
        $region55: #{mlp_pair_encoder.1} parent=43 // pred_region
          %289 = dma.done [#allocation6], 16
        $region56: #{mlp_pair_encoder.1} parent=43 // pred_fallthru
          _
        // Predicated region
        $region57: #{mlp_pair_encoder.1} parent=43 // pred_check
          %p290 = pneg %p135
        $region58: #{mlp_pair_encoder.1} parent=43 // pred_check_branch
          %292 = sbr.rel (%p290) target = $region60
        $region59: #{mlp_pair_encoder.1} parent=43 // pred_region
          %293 = dma.done [#allocation9], 2048
        $region60: #{mlp_pair_encoder.1} parent=43 // pred_fallthru
          _
        %s294 = sand.u32 %s33, 1
        %s295 = scalar_lea.sflag [#allocation3], %s294
        %s296 = sand.u32 %s33, 1
        %s297 = smul.addr %s296, 8
        %s298 = scalar_lea.vmem [#allocation2], %s297
        %p299 = pneg %p46
        %p300 = pneg %p43
        %p301 = scmp.lt.s32.totalorder %s25, 1
        %s302 = scalar_select %p301, %s25, 1
        %s303 = smul.addr %s302, 8
        %s304 = scalar_lea.vmem %s1, %s303
        %p305 = pneg %p72
        %p306 = pneg %p69
        %p307 = pneg %p93
        %p308 = pneg %p90
        %p309 = pneg %p114
        %p310 = pneg %p111
        %p311 = pneg %p135
        %p312 = pneg %p132
        %p313 = pneg %p156
        %p314 = pneg %p153
        %p315 = pneg %p182
        %p316 = pneg %p179
        %s317 = sand.u32 %s169, 1
        %s318 = scalar_lea.sflag [#allocation4], %s317
        %s319 = sand.u32 %s169, 1
        %s320 = smul.addr %s319, 8
        %s321 = scalar_lea.vmem [#allocation10], %s320
        %p322 = scmp.lt.s32.totalorder %s25, 1
        %s323 = scalar_select %p322, %s25, 1
        %s324 = smul.addr %s323, 8
        %s325 = scalar_lea.vmem %s1, %s324
        %v326 = vld [vmem:[%s277] sm:$0xff]
        %v327 = vld [vmem:[%s325] sm:$0xff]
        %v328 = vld [vmem:[#allocation5] sm:$0xff]
        %v329 = vld [vmem:[#allocation5 + $0x8] sm:$0xff]
        %v330 = vld [vmem:[#allocation5 + $0x10] sm:$0xff]
        %v331 = vld [vmem:[#allocation5 + $0x18] sm:$0xff]
        %v332 = vld [vmem:[#allocation5 + $0x20] sm:$0xff]
        %v333 = vld [vmem:[#allocation5 + $0x28] sm:$0xff]
        %v334 = vld [vmem:[#allocation5 + $0x30] sm:$0xff]
        %v335 = vld [vmem:[#allocation5 + $0x38] sm:$0xff]
        %v336 = vld [vmem:[#allocation5 + $0x40] sm:$0xff]
        %v337 = vld [vmem:[#allocation5 + $0x48] sm:$0xff]
        %v338 = vld [vmem:[#allocation5 + $0x50] sm:$0xff]
        %v339 = vld [vmem:[#allocation5 + $0x58] sm:$0xff]
        %v340 = vld [vmem:[#allocation5 + $0x60] sm:$0xff]
        %v341 = vld [vmem:[#allocation5 + $0x68] sm:$0xff]
        %v342 = vld [vmem:[#allocation5 + $0x70] sm:$0xff]
        %v343 = vld [vmem:[#allocation5 + $0x78] sm:$0xff]
        %v344 = vld [vmem:[#allocation5 + $0x80] sm:$0xff]
        %v345 = vld [vmem:[#allocation5 + $0x88] sm:$0xff]
        %v346 = vld [vmem:[#allocation5 + $0x90] sm:$0xff]
        %v347 = vld [vmem:[#allocation5 + $0x98] sm:$0xff]
        %v348 = vld [vmem:[#allocation5 + $0xa0] sm:$0xff]
        %v349 = vld [vmem:[#allocation5 + $0xa8] sm:$0xff]
        %v350 = vld [vmem:[#allocation5 + $0xb0] sm:$0xff]
        %v351 = vld [vmem:[#allocation5 + $0xb8] sm:$0xff]
        %v352 = vld [vmem:[#allocation5 + $0xc0] sm:$0xff]
        %v353 = vld [vmem:[#allocation5 + $0xc8] sm:$0xff]
        %v354 = vld [vmem:[#allocation5 + $0xd0] sm:$0xff]
        %v355 = vld [vmem:[#allocation5 + $0xd8] sm:$0xff]
        %v356 = vld [vmem:[#allocation5 + $0xe0] sm:$0xff]
        %v357 = vld [vmem:[#allocation5 + $0xe8] sm:$0xff]
        %v358 = vld [vmem:[#allocation5 + $0xf0] sm:$0xff]
        %v359 = vld [vmem:[#allocation5 + $0xf8] sm:$0xff]
        %360 = vmatprep.subr.mxu0 0.0
        %361 = vmatpush1.msra.mxu0 %v344
        %362 = vmatprep.subr.mxu0 0.0
        %363 = vmatpush1.msra.mxu0 %v345
        %364 = vmatprep.subr.mxu0 0.0
        %365 = vmatpush1.msra.mxu0 %v346
        %366 = vmatprep.subr.mxu0 0.0
        %367 = vmatpush1.msra.mxu0 %v347
        %368 = vmatprep.subr.mxu0 0.0
        %369 = vmatpush1.msra.mxu0 %v348
        %370 = vmatprep.subr.mxu0 0.0
        %371 = vmatpush1.msra.mxu0 %v349
        %372 = vmatprep.subr.mxu0 0.0
        %373 = vmatpush1.msra.mxu0 %v350
        %374 = vmatprep.subr.mxu0 0.0
        %375 = vmatpush1.msra.mxu0 %v351
        %376 = vmatprep.subr.mxu0 0.0
        %377 = vmatpush1.msra.mxu0 %v352
        %378 = vmatprep.subr.mxu0 0.0
        %379 = vmatpush1.msra.mxu0 %v353
        %380 = vmatprep.subr.mxu0 0.0
        %381 = vmatpush1.msra.mxu0 %v354
        %382 = vmatprep.subr.mxu0 0.0
        %383 = vmatpush1.msra.mxu0 %v355
        %384 = vmatprep.subr.mxu0 0.0
        %385 = vmatpush1.msra.mxu0 %v356
        %386 = vmatprep.subr.mxu0 0.0
        %387 = vmatpush1.msra.mxu0 %v357
        %388 = vmatprep.subr.mxu0 0.0
        %389 = vmatpush1.msra.mxu0 %v358
        %390 = vmatprep.subr.mxu0 0.0
        %391 = vmatpush1.msra.mxu0 %v359
        %392 = vmatprep.subr.mxu0 0.0
        %393 = vmatpush1.msra.mxu0 0.0
        %394 = vmatprep.subr.mxu0 0.0
        %395 = vmatpush1.msra.mxu0 0.0
        %396 = vmatprep.subr.mxu0 0.0
        %397 = vmatpush1.msra.mxu0 0.0
        %398 = vmatprep.subr.mxu0 0.0
        %399 = vmatpush1.msra.mxu0 0.0
        %400 = vmatprep.subr.mxu0 0.0
        %401 = vmatpush1.msra.mxu0 0.0
        %402 = vmatprep.subr.mxu0 0.0
        %403 = vmatpush1.msra.mxu0 0.0
        %404 = vmatprep.subr.mxu0 0.0
        %405 = vmatpush1.msra.mxu0 0.0
        %406 = vmatprep.subr.mxu0 0.0
        %407 = vmatpush1.msra.mxu0 0.0
        %408 = vmatprep.subr.mxu0 0.0
        %409 = vmatpush1.msra.mxu0 0.0
        %410 = vmatprep.subr.mxu0 0.0
        %411 = vmatpush1.msra.mxu0 0.0
        %412 = vmatprep.subr.mxu0 0.0
        %413 = vmatpush1.msra.mxu0 0.0
        %414 = vmatprep.subr.mxu0 0.0
        %415 = vmatpush1.msra.mxu0 0.0
        %416 = vmatprep.subr.mxu0 0.0
        %417 = vmatpush1.msra.mxu0 0.0
        %418 = vmatprep.subr.mxu0 0.0
        %419 = vmatpush1.msra.mxu0 0.0
        %420 = vmatprep.subr.mxu0 0.0
        %421 = vmatpush1.msra.mxu0 0.0
        %422 = vmatprep.subr.mxu0 0.0
        %423 = vmatpush1.msra.mxu0 0.0
        %424 = vmatprep.mubr.f32.mxu0 0.0
        %425 = vmatmul.mubr.f32.gmra.mrb[0].mxu0 %v327
        %v426 = vpop.f32.mrb[0].mxu0
        %v427 = vadd.f32 0.0, %v426
        %v428 = vpop.f32.mrb[0].mxu0
        %429 = vdwg.mxu0
        %430 = vmatprep.subr.mxu0 0.0
        %431 = vmatpush1.msra.mxu0 %v328
        %432 = vmatprep.subr.mxu0 0.0
        %433 = vmatpush1.msra.mxu0 %v329
        %434 = vmatprep.subr.mxu0 0.0
        %435 = vmatpush1.msra.mxu0 %v330
        %436 = vmatprep.subr.mxu0 0.0
        %437 = vmatpush1.msra.mxu0 %v331
        %438 = vmatprep.subr.mxu0 0.0
        %439 = vmatpush1.msra.mxu0 %v332
        %440 = vmatprep.subr.mxu0 0.0
        %441 = vmatpush1.msra.mxu0 %v333
        %442 = vmatprep.subr.mxu0 0.0
        %443 = vmatpush1.msra.mxu0 %v334
        %444 = vmatprep.subr.mxu0 0.0
        %445 = vmatpush1.msra.mxu0 %v335
        %446 = vmatprep.subr.mxu0 0.0
        %447 = vmatpush1.msra.mxu0 %v336
        %448 = vmatprep.subr.mxu0 0.0
        %449 = vmatpush1.msra.mxu0 %v337
        %450 = vmatprep.subr.mxu0 0.0
        %451 = vmatpush1.msra.mxu0 %v338
        %452 = vmatprep.subr.mxu0 0.0
        %453 = vmatpush1.msra.mxu0 %v339
        %454 = vmatprep.subr.mxu0 0.0
        %455 = vmatpush1.msra.mxu0 %v340
        %456 = vmatprep.subr.mxu0 0.0
        %457 = vmatpush1.msra.mxu0 %v341
        %458 = vmatprep.subr.mxu0 0.0
        %459 = vmatpush1.msra.mxu0 %v342
        %460 = vmatprep.subr.mxu0 0.0
        %461 = vmatpush1.msra.mxu0 %v343
        %462 = vmatprep.subr.mxu0 0.0
        %463 = vmatpush1.msra.mxu0 0.0
        %464 = vmatprep.subr.mxu0 0.0
        %465 = vmatpush1.msra.mxu0 0.0
        %466 = vmatprep.subr.mxu0 0.0
        %467 = vmatpush1.msra.mxu0 0.0
        %468 = vmatprep.subr.mxu0 0.0
        %469 = vmatpush1.msra.mxu0 0.0
        %470 = vmatprep.subr.mxu0 0.0
        %471 = vmatpush1.msra.mxu0 0.0
        %472 = vmatprep.subr.mxu0 0.0
        %473 = vmatpush1.msra.mxu0 0.0
        %474 = vmatprep.subr.mxu0 0.0
        %475 = vmatpush1.msra.mxu0 0.0
        %476 = vmatprep.subr.mxu0 0.0
        %477 = vmatpush1.msra.mxu0 0.0
        %478 = vmatprep.subr.mxu0 0.0
        %479 = vmatpush1.msra.mxu0 0.0
        %480 = vmatprep.subr.mxu0 0.0
        %481 = vmatpush1.msra.mxu0 0.0
        %482 = vmatprep.subr.mxu0 0.0
        %483 = vmatpush1.msra.mxu0 0.0
        %484 = vmatprep.subr.mxu0 0.0
        %485 = vmatpush1.msra.mxu0 0.0
        %486 = vmatprep.subr.mxu0 0.0
        %487 = vmatpush1.msra.mxu0 0.0
        %488 = vmatprep.subr.mxu0 0.0
        %489 = vmatpush1.msra.mxu0 0.0
        %490 = vmatprep.subr.mxu0 0.0
        %491 = vmatpush1.msra.mxu0 0.0
        %492 = vmatprep.subr.mxu0 0.0
        %493 = vmatpush1.msra.mxu0 0.0
        %494 = vmatprep.mubr.f32.mxu0 0.0
        %495 = vmatmul.mubr.f32.gmra.mrb[0].mxu0 %v326
        %v496 = vpop.f32.mrb[0].mxu0
        %v497 = vadd.f32 %v427, %v496
        %v498 = vpop.f32.mrb[0].mxu0
        %499 = vdwg.mxu0
        %v500 = vmul.f32 %v326, %v327
        %v501 = vld [vmem:[#allocation5 + $0x100] sm:$0xff]
        %v502 = vld [vmem:[#allocation5 + $0x108] sm:$0xff]
        %v503 = vld [vmem:[#allocation5 + $0x110] sm:$0xff]
        %v504 = vld [vmem:[#allocation5 + $0x118] sm:$0xff]
        %v505 = vld [vmem:[#allocation5 + $0x120] sm:$0xff]
        %v506 = vld [vmem:[#allocation5 + $0x128] sm:$0xff]
        %v507 = vld [vmem:[#allocation5 + $0x130] sm:$0xff]
        %v508 = vld [vmem:[#allocation5 + $0x138] sm:$0xff]
        %v509 = vld [vmem:[#allocation5 + $0x140] sm:$0xff]
        %v510 = vld [vmem:[#allocation5 + $0x148] sm:$0xff]
        %v511 = vld [vmem:[#allocation5 + $0x150] sm:$0xff]
        %v512 = vld [vmem:[#allocation5 + $0x158] sm:$0xff]
        %v513 = vld [vmem:[#allocation5 + $0x160] sm:$0xff]
        %v514 = vld [vmem:[#allocation5 + $0x168] sm:$0xff]
        %v515 = vld [vmem:[#allocation5 + $0x170] sm:$0xff]
        %v516 = vld [vmem:[#allocation5 + $0x178] sm:$0xff]
        %517 = vmatprep.subr.mxu0 0.0
        %518 = vmatpush1.msra.mxu0 %v501
        %519 = vmatprep.subr.mxu0 0.0
        %520 = vmatpush1.msra.mxu0 %v502
        %521 = vmatprep.subr.mxu0 0.0
        %522 = vmatpush1.msra.mxu0 %v503
        %523 = vmatprep.subr.mxu0 0.0
        %524 = vmatpush1.msra.mxu0 %v504
        %525 = vmatprep.subr.mxu0 0.0
        %526 = vmatpush1.msra.mxu0 %v505
        %527 = vmatprep.subr.mxu0 0.0
        %528 = vmatpush1.msra.mxu0 %v506
        %529 = vmatprep.subr.mxu0 0.0
        %530 = vmatpush1.msra.mxu0 %v507
        %531 = vmatprep.subr.mxu0 0.0
        %532 = vmatpush1.msra.mxu0 %v508
        %533 = vmatprep.subr.mxu0 0.0
        %534 = vmatpush1.msra.mxu0 %v509
        %535 = vmatprep.subr.mxu0 0.0
        %536 = vmatpush1.msra.mxu0 %v510
        %537 = vmatprep.subr.mxu0 0.0
        %538 = vmatpush1.msra.mxu0 %v511
        %539 = vmatprep.subr.mxu0 0.0
        %540 = vmatpush1.msra.mxu0 %v512
        %541 = vmatprep.subr.mxu0 0.0
        %542 = vmatpush1.msra.mxu0 %v513
        %543 = vmatprep.subr.mxu0 0.0
        %544 = vmatpush1.msra.mxu0 %v514
        %545 = vmatprep.subr.mxu0 0.0
        %546 = vmatpush1.msra.mxu0 %v515
        %547 = vmatprep.subr.mxu0 0.0
        %548 = vmatpush1.msra.mxu0 %v516
        %549 = vmatprep.subr.mxu0 0.0
        %550 = vmatpush1.msra.mxu0 0.0
        %551 = vmatprep.subr.mxu0 0.0
        %552 = vmatpush1.msra.mxu0 0.0
        %553 = vmatprep.subr.mxu0 0.0
        %554 = vmatpush1.msra.mxu0 0.0
        %555 = vmatprep.subr.mxu0 0.0
        %556 = vmatpush1.msra.mxu0 0.0
        %557 = vmatprep.subr.mxu0 0.0
        %558 = vmatpush1.msra.mxu0 0.0
        %559 = vmatprep.subr.mxu0 0.0
        %560 = vmatpush1.msra.mxu0 0.0
        %561 = vmatprep.subr.mxu0 0.0
        %562 = vmatpush1.msra.mxu0 0.0
        %563 = vmatprep.subr.mxu0 0.0
        %564 = vmatpush1.msra.mxu0 0.0
        %565 = vmatprep.subr.mxu0 0.0
        %566 = vmatpush1.msra.mxu0 0.0
        %567 = vmatprep.subr.mxu0 0.0
        %568 = vmatpush1.msra.mxu0 0.0
        %569 = vmatprep.subr.mxu0 0.0
        %570 = vmatpush1.msra.mxu0 0.0
        %571 = vmatprep.subr.mxu0 0.0
        %572 = vmatpush1.msra.mxu0 0.0
        %573 = vmatprep.subr.mxu0 0.0
        %574 = vmatpush1.msra.mxu0 0.0
        %575 = vmatprep.subr.mxu0 0.0
        %576 = vmatpush1.msra.mxu0 0.0
        %577 = vmatprep.subr.mxu0 0.0
        %578 = vmatpush1.msra.mxu0 0.0
        %579 = vmatprep.subr.mxu0 0.0
        %580 = vmatpush1.msra.mxu0 0.0
        %581 = vmatprep.mubr.f32.mxu0 0.0
        %582 = vmatmul.mubr.f32.gmra.mrb[0].mxu0 %v500
        %v583 = vpop.f32.mrb[0].mxu0
        %v584 = vadd.f32 0.0, %v583
        %v585 = vpop.f32.mrb[0].mxu0
        %586 = vdwg.mxu0
        %v587 = vadd.f32 %v497, %v584
        %v588 = vld [vmem:[#allocation7] sm:$0x1]
        %v590 = vlaneseq
        %v591 = vshrl.u32 %v590, 7
        %v592 = vsub.s32 0, %v591
        %v593 = vrot.slane %v588, %v592
        %v595 = vadd.f32 %v587, %v593
        %v596 = vmax.f32 %v595, 0.0
        %v597 = vld [vmem:[#allocation8] sm:$0xff]
        %v598 = vld [vmem:[#allocation8 + $0x8] sm:$0xff]
        %v599 = vld [vmem:[#allocation8 + $0x10] sm:$0xff]
        %v600 = vld [vmem:[#allocation8 + $0x18] sm:$0xff]
        %v601 = vld [vmem:[#allocation8 + $0x20] sm:$0xff]
        %v602 = vld [vmem:[#allocation8 + $0x28] sm:$0xff]
        %v603 = vld [vmem:[#allocation8 + $0x30] sm:$0xff]
        %v604 = vld [vmem:[#allocation8 + $0x38] sm:$0xff]
        %v605 = vld [vmem:[#allocation8 + $0x40] sm:$0xff]
        %v606 = vld [vmem:[#allocation8 + $0x48] sm:$0xff]
        %v607 = vld [vmem:[#allocation8 + $0x50] sm:$0xff]
        %v608 = vld [vmem:[#allocation8 + $0x58] sm:$0xff]
        %v609 = vld [vmem:[#allocation8 + $0x60] sm:$0xff]
        %v610 = vld [vmem:[#allocation8 + $0x68] sm:$0xff]
        %v611 = vld [vmem:[#allocation8 + $0x70] sm:$0xff]
        %v612 = vld [vmem:[#allocation8 + $0x78] sm:$0xff]
        %v613 = vld [vmem:[%s5] sm:$0x1]
        %v615 = vlaneseq
        %v616 = vshrl.u32 %v615, 7
        %v617 = vsub.s32 0, %v616
        %v618 = vrot.slane %v613, %v617
        %620 = vmatprep.subr.mxu0 0.0
        %621 = vmatpush1.msra.mxu0 %v597
        %622 = vmatprep.subr.mxu0 0.0
        %623 = vmatpush1.msra.mxu0 %v598
        %624 = vmatprep.subr.mxu0 0.0
        %625 = vmatpush1.msra.mxu0 %v599
        %626 = vmatprep.subr.mxu0 0.0
        %627 = vmatpush1.msra.mxu0 %v600
        %628 = vmatprep.subr.mxu0 0.0
        %629 = vmatpush1.msra.mxu0 %v601
        %630 = vmatprep.subr.mxu0 0.0
        %631 = vmatpush1.msra.mxu0 %v602
        %632 = vmatprep.subr.mxu0 0.0
        %633 = vmatpush1.msra.mxu0 %v603
        %634 = vmatprep.subr.mxu0 0.0
        %635 = vmatpush1.msra.mxu0 %v604
        %636 = vmatprep.subr.mxu0 0.0
        %637 = vmatpush1.msra.mxu0 %v605
        %638 = vmatprep.subr.mxu0 0.0
        %639 = vmatpush1.msra.mxu0 %v606
        %640 = vmatprep.subr.mxu0 0.0
        %641 = vmatpush1.msra.mxu0 %v607
        %642 = vmatprep.subr.mxu0 0.0
        %643 = vmatpush1.msra.mxu0 %v608
        %644 = vmatprep.subr.mxu0 0.0
        %645 = vmatpush1.msra.mxu0 %v609
        %646 = vmatprep.subr.mxu0 0.0
        %647 = vmatpush1.msra.mxu0 %v610
        %648 = vmatprep.subr.mxu0 0.0
        %649 = vmatpush1.msra.mxu0 %v611
        %650 = vmatprep.subr.mxu0 0.0
        %651 = vmatpush1.msra.mxu0 %v612
        %652 = vmatprep.subr.mxu0 0.0
        %653 = vmatpush1.msra.mxu0 0.0
        %654 = vmatprep.subr.mxu0 0.0
        %655 = vmatpush1.msra.mxu0 0.0
        %656 = vmatprep.subr.mxu0 0.0
        %657 = vmatpush1.msra.mxu0 0.0
        %658 = vmatprep.subr.mxu0 0.0
        %659 = vmatpush1.msra.mxu0 0.0
        %660 = vmatprep.subr.mxu0 0.0
        %661 = vmatpush1.msra.mxu0 0.0
        %662 = vmatprep.subr.mxu0 0.0
        %663 = vmatpush1.msra.mxu0 0.0
        %664 = vmatprep.subr.mxu0 0.0
        %665 = vmatpush1.msra.mxu0 0.0
        %666 = vmatprep.subr.mxu0 0.0
        %667 = vmatpush1.msra.mxu0 0.0
        %668 = vmatprep.subr.mxu0 0.0
        %669 = vmatpush1.msra.mxu0 0.0
        %670 = vmatprep.subr.mxu0 0.0
        %671 = vmatpush1.msra.mxu0 0.0
        %672 = vmatprep.subr.mxu0 0.0
        %673 = vmatpush1.msra.mxu0 0.0
        %674 = vmatprep.subr.mxu0 0.0
        %675 = vmatpush1.msra.mxu0 0.0
        %676 = vmatprep.subr.mxu0 0.0
        %677 = vmatpush1.msra.mxu0 0.0
        %678 = vmatprep.subr.mxu0 0.0
        %679 = vmatpush1.msra.mxu0 0.0
        %680 = vmatprep.subr.mxu0 0.0
        %681 = vmatpush1.msra.mxu0 0.0
        %682 = vmatprep.subr.mxu0 0.0
        %683 = vmatpush1.msra.mxu0 0.0
        %684 = vmatprep.mubr.f32.mxu0 0.0
        %685 = vmatmul.mubr.f32.gmra.mrb[0].mxu0 %v596
        %v686 = vpop.f32.mrb[0].mxu0
        %v687 = vadd.f32 %v618, %v686
        %v688 = vpop.f32.mrb[0].mxu0
        %689 = vdwg.mxu0
        %690 = vst [vmem:[%s321] sm:$0xff] %v687
        %s691 = sand.u32 %s169, 1
        %s692 = scalar_lea.sflag [#allocation4], %s691
        %s693 = sand.u32 %s169, 1
        %s694 = smul.addr %s693, 8
        %s695 = scalar_lea.vmem [#allocation10], %s694
        // Predicated region
        $region61: #{mlp_pair_encoder.1} parent=43 // pred_check
          %p696 = pneg %p179
        $region62: #{mlp_pair_encoder.1} parent=43 // pred_check_branch
          %698 = sbr.rel (%p696) target = $region64
        $region63: #{mlp_pair_encoder.1} parent=43 // pred_region
          %s700 = ssub.s32 128, 128
          %701 = vsyncadd %s692, %s700
          %s702 = smul.addr %s25, 128
          %s703 = scalar_lea.hbm %s6, %s702
          %s705 = sshll.u32 %s695, 4
          %s706 = int_to_ptr.vmem [resolvable:$true] %s705
          %708 = dma.vmem_to_hbm [thread:$0]  %s706, 128, %s703, %s692
        $region64: #{mlp_pair_encoder.1} parent=43 // pred_fallthru
          _
      $region44: #{mlp_pair_encoder.1} parent=5 // pred_fallthru
        _
      %p709 = scmp.le.s32.totalorder 2, %s20
      // Predicated region
      $region65: #{mlp_pair_encoder.1} parent=5 // pred_check
        %p710 = pneg %p709
      $region66: #{mlp_pair_encoder.1} parent=5 // pred_check_branch
        %712 = sbr.rel (%p710) target = $region68
      $region67: #{mlp_pair_encoder.1} parent=5 // pred_region
        %s713 = ssub.s32 %s20, 2
        // Predicated region
        $region69: #{mlp_pair_encoder.1} parent=67 // pred_check
          %p714 = pneg %p185
        $region70: #{mlp_pair_encoder.1} parent=67 // pred_check_branch
          %716 = sbr.rel (%p714) target = $region72
        $region71: #{mlp_pair_encoder.1} parent=67 // pred_region
          %s717 = sand.u32 %s170, 1
          %s718 = scalar_lea.sflag [#allocation4], %s717
          %s719 = sand.u32 %s170, 1
          %s720 = smul.addr %s719, 8
          %s721 = scalar_lea.vmem [#allocation10], %s720
          %722 = dma.done %s718, 128
        $region72: #{mlp_pair_encoder.1} parent=67 // pred_fallthru
          _
      $region68: #{mlp_pair_encoder.1} parent=5 // pred_fallthru
        _
    $region6: #{mlp_pair_encoder.1} parent=1 // loop_footer
      %s24 = sadd.s32 1, %s20
    $region7: #{mlp_pair_encoder.1} parent=1 // loop_footer_branch
      %19 = sbr.rel target = $region3
    $region8: #{mlp_pair_encoder.1} parent=1 // loop_exit
      _
    %723 = vsyncpa [#allocation3], 1
    %s724 = scalar_lea.sflag [#allocation3], 1
    %725 = vsyncpa %s724, 1
    %726 = vsyncpa [#allocation6], 1
    %727 = vsyncpa [#allocation9], 1
    %728 = vsyncpa [#allocation4], 1
    %s729 = scalar_lea.sflag [#allocation4], 1
    %730 = vsyncpa %s729, 1

</llo_original>
